<compile_context>
chip_gen: v7x
topology: tpu7x:2x2x1
jax: 0.10.0
libtpu: 0.0.40
codegen_flags: <defaults>
</compile_context>

<pallas_src>
import jax
import jax.numpy as jnp
from jax.experimental import pallas as pl
from jax.experimental.pallas import tpu as pltpu


def _make_hbm_copy_kernel(chunk_rows):
    """Kernel: each grid step copies one contiguous row slab HBM -> HBM."""

    def kernel(x_hbm, o_hbm, sem):
        start = pl.program_id(0) * chunk_rows
        if chunk_rows % 8 == 0:
            start = pl.multiple_of(start, 8)
        cp = pltpu.make_async_copy(
            x_hbm.at[pl.ds(start, chunk_rows), :],
            o_hbm.at[pl.ds(start, chunk_rows), :],
            sem,
        )
        cp.start()
        cp.wait()

    return kernel


def _pick_lanes(total):
    """Widest power-of-two lane factor (>=128) dividing the element count."""
    for lanes in (2048, 1024, 512, 256, 128):
        if total % lanes == 0:
            return lanes
    return None


def _pick_num_chunks(rows, nbytes):
    """1 chunk for small tensors; an even split of large tensors so the
    'parallel' grid axis divides cleanly across two TensorCores (v7x)."""
    if nbytes < (8 << 20):
        return 1
    for n in (8, 4, 2):
        if rows % (n * 8) == 0:      # keep chunk_rows a multiple of 8
            return n
    return 1


def flatten_block(spike, countLog=False, force_copy=False):
    """Pallas/JAX equivalent of flattenBlock.forward.

    spike: (N, C, H, W, T) array.
    Returns spike.reshape((N, C*H*W, 1, 1, T)); with countLog=True returns
    (reshaped, None), matching the PyTorch module.

    force_copy=True requests an explicit materializing HBM->HBM copy via a
    Pallas DMA kernel (otherwise the flatten is a free metadata reshape).
    """
    N, C, H, W, T = spike.shape
    CHW = C * H * W
    out_shape_5d = (N, CHW, 1, 1, T)

    total = N * CHW * T
    itemsize = jnp.dtype(spike.dtype).itemsize
    lanes = _pick_lanes(total) if force_copy else None

    if lanes is None:
        # Default / fallback: zero-cost metadata reshape (no kernel).
        out = spike.reshape(out_shape_5d)
    else:
        rows = total // lanes
        nbytes = total * itemsize
        num_chunks = _pick_num_chunks(rows, nbytes)
        chunk_rows = rows // num_chunks

        # Lane-dense 2-D view of the same linear data (free metadata reshape).
        x2d = spike.reshape((rows, lanes))

        out2d = pl.pallas_call(
            _make_hbm_copy_kernel(chunk_rows),
            out_shape=jax.ShapeDtypeStruct((rows, lanes), spike.dtype),
            grid_spec=pltpu.PrefetchScalarGridSpec(
                num_scalar_prefetch=0,
                grid=(num_chunks,),
                # Both operands stay in HBM: no VMEM bounce, no tile ceiling.
                in_specs=[pl.BlockSpec(memory_space=pl.ANY)],
                out_specs=pl.BlockSpec(memory_space=pl.ANY),
                scratch_shapes=[pltpu.SemaphoreType.DMA(())],
            ),
            compiler_params=pltpu.CompilerParams(
                dimension_semantics=("parallel",),
            ),
            # Memory-bound, zero-compute custom call.
            cost_estimate=pl.CostEstimate(
                flops=0,
                transcendentals=0,
                bytes_accessed=2 * total * itemsize,
            ),
        )(x2d)

        out = out2d.reshape(out_shape_5d)

    if countLog:
        return out, None
    return out


if __name__ == "__main__":
    key = jax.random.PRNGKey(0)
    # Small shapes consistent with the SLAYER block: NCHWT.
    N, C, H, W, T = 2, 4, 16, 16, 8
    # Spike tensors are {0,1}-valued floats in SLAYER; use Bernoulli spikes.
    spike = (jax.random.uniform(key, (N, C, H, W, T)) < 0.3).astype(jnp.float32)

    ref = spike.reshape((N, -1, 1, 1, T))

    # Default path: zero-cost metadata reshape (the recommended fast path).
    out = flatten_block(spike, countLog=False)
    out = jax.block_until_ready(out)
    assert out.shape == (N, C * H * W, 1, 1, T)
    assert jnp.array_equal(out, ref)

    # countLog=True path (same data, plus None spike-count log).
    out2, cnt = flatten_block(spike, countLog=True)
    out2 = jax.block_until_ready(out2)
    assert cnt is None
    assert jnp.array_equal(out2, ref)

    # Explicit materializing copy path: HBM->HBM DMA Pallas kernel.
    out3 = flatten_block(spike, countLog=False, force_copy=True)
    out3 = jax.block_until_ready(out3)
    assert out3.shape == (N, C * H * W, 1, 1, T)
    assert jnp.array_equal(out3, ref)

    out4, cnt4 = flatten_block(spike, countLog=True, force_copy=True)
    out4 = jax.block_until_ready(out4)
    assert cnt4 is None
    assert jnp.array_equal(out4, ref)

    print("KERNEL_OK")
</pallas_src>

<mosaic_0001>
module attributes {stable_mosaic.version = 11 : i64} {
  func.func @kernel(%arg0: i32, %arg1: memref<8x2048xf32, #tpu.memory_space<any>>, %arg2: memref<8x2048xf32, #tpu.memory_space<any>>, %arg3: memref<!tpu.dma_semaphore, #tpu.memory_space<semaphore_mem>>) attributes {dimension_semantics = [#tpu.dimension_semantics<parallel>], iteration_bounds = array<i64: 1>, scalar_prefetch = 0 : i64, scratch_operands = 1 : i64, tpu.core_type = #tpu.core_type<tc>, window_params = [{}, {}]} {
    %c8_i32 = arith.constant 8 : i32
    %0 = arith.muli %arg0, %c8_i32 : i32
    %1 = tpu.assume_multiple %0, 8 : i32
    %c0_i32 = arith.constant 0 : i32
    %2 = tpu.memref_slice %arg1[%1, %c0_i32] : memref<8x2048xf32, #tpu.memory_space<any>> -> memref<8x2048xf32, #tpu.memory_space<any>>
    %c0_i32_0 = arith.constant 0 : i32
    %3 = tpu.memref_slice %arg2[%1, %c0_i32_0] : memref<8x2048xf32, #tpu.memory_space<any>> -> memref<8x2048xf32, #tpu.memory_space<any>>
    tpu.enqueue_dma source(%2 : memref<8x2048xf32, #tpu.memory_space<any>>) target(%3 : memref<8x2048xf32, #tpu.memory_space<any>>) target_semaphore(%arg3 : memref<!tpu.dma_semaphore, #tpu.memory_space<semaphore_mem>>)
    %c0_i32_1 = arith.constant 0 : i32
    %4 = tpu.memref_slice %arg1[%1, %c0_i32_1] : memref<8x2048xf32, #tpu.memory_space<any>> -> memref<8x2048xf32, #tpu.memory_space<any>>
    %c0_i32_2 = arith.constant 0 : i32
    %5 = tpu.memref_slice %arg2[%1, %c0_i32_2] : memref<8x2048xf32, #tpu.memory_space<any>> -> memref<8x2048xf32, #tpu.memory_space<any>>
    tpu.wait_dma2 semaphore(%arg3 : memref<!tpu.dma_semaphore, #tpu.memory_space<semaphore_mem>>) src(%4 : memref<8x2048xf32, #tpu.memory_space<any>>) dst(%5 : memref<8x2048xf32, #tpu.memory_space<any>>)
    return
  }
}

</mosaic_0001>

<llo_original>
// kernel: tpu_custom_call.1
$region0: #{tpu_custom_call.1}
  #allocation0 [shape = 'u32[]', space=smem, size = 0x4, offset = 0x4, fixed_abs, tag = 'smem constant byte address 0x4 - core index']
  #allocation1 [shape = 'u32[144,128]{1,0:T(1,128)}', space=vmem, size = 0x12000, scoped, tag = 'internal scratch']
  #allocation2 [shape = 's32[1]{0}', space=sflag, size = 0x4, scoped, tag = 'scratch operand']
  #allocation3 [shape = 's32[]', space=sflag, size = 0x4, offset = 0, fixed_abs, tag = 'sflag constant byte address 0x0 - dummy sync flag']
  #allocation4 [shape = 'u32[0]{0}', space=smem, size = 0, offset = 0, fixed_abs, tag = 'smem constant byte address 0x0 - null']
  %s0 = inlined_call_operand.hbm [shape: f32[8,2048], index: 0, kind: input, shape index: {}]
  %s1 = inlined_call_operand.hbm [shape: f32[8,2048], index: 1, kind: output, shape index: {}]
  %s2 = sld [smem:[#allocation0]]
  $region2: #{tpu_custom_call.1} parent=0
    _
  %s4 = ssub.s32 1, %s2
  %s5 = scalar_select 0, %s4, %s2
  %s6 = smul.u32 0, 8
  %s7 = sshra.s32 %s6, 3
  %s8 = sand.u32 %s6, 7
  %s9 = smul.u32 %s7, 16
  %s10 = smul.addr %s9, 128
  %s11 = scalar_lea.hbm %s0, %s10
  %s12 = smul.addr %s9, 128
  %s13 = scalar_lea.hbm %s1, %s12
  %s15 = sshll.u32 1, 14
  %s16 = sxor.u32 4294967295, %s15
  %s19 = sshll.u32 3, 24
  %s20 = sxor.u32 4294967295, %s19
  %s21 = sand.u32 0, %s20
  %s23 = sor.u32 %s21, 0
  %26 = dma.general %s11, 2048, %s13, [#allocation2], [#allocation3], [#allocation4], %s23, 0
  %s27 = smul.u32 8, 1
  %s28 = smul.u32 %s27, 16
  %s29 = sshll.u32 %s28, 4
  %30 = dma.done [#allocation2], %s29
  %31 = vsyncmov [#allocation2]
  %s32 = vpop.sfrf %31
  %p33 = scmp.eq.s32.totalorder %s32, 0
  %p34 = pneg %p33
  %36 = shalt.err (%p34)

</llo_original>
